<compile_context>
chip_gen: v5e
topology: v5e:2x2
jax: 0.10.0
libtpu: 0.0.40
codegen_flags: <defaults>
</compile_context>

<pallas_src>
import jax
import jax.numpy as jnp
from jax.experimental import pallas as pl
from jax.experimental.pallas import tpu as pltpu

EPS = 1e-7
VMEM_LIMIT = 32 * 1024 * 1024


def _cdiv(a, b):
    return -(-a // b)


def _round_up(x, m):
    return ((x + m - 1) // m) * m


def _corners(x, y, w, h):
    hw = w * 0.5
    hh = h * 0.5
    return x - hw, x + hw, y - hh, y + hh


# ----------------------------- Pallas kernels -----------------------------

def _box_kernel(p_ref, iou_ref, siou_ref):
    """Fused assignment-IoU + SIoU on a dense candidate tile.

    Field rows of p_ref (each read individually as a [TC, 128] block):
      0..3  gt box (cx, cy, w, h)       [feature-map pixels]
      4..5  candidate grid cell (x, y)
      6..7  anchor (w, h)               [feature-map pixels]
      8..11 predicted deltas (dx, dy, dw, dh)
    """
    gcx = p_ref[0]
    gcy = p_ref[1]
    gw = p_ref[2]
    gh = p_ref[3]
    px = p_ref[4]
    py = p_ref[5]
    aw = p_ref[6]
    ah = p_ref[7]
    dx = p_ref[8]
    dy = p_ref[9]
    dw = p_ref[10]
    dh = p_ref[11]

    # shared gt corners
    g_x1, g_x2, g_y1, g_y2 = _corners(gcx, gcy, gw, gh)
    gt_w = g_x2 - g_x1
    gt_h = g_y2 - g_y1 + EPS

    # ---- assignment IoU: box1 = gt, box2 = (grid cell, anchor size) proposal ----
    # Exact divide here: this value is compared against the 0.7 threshold.
    a_x1, a_x2, a_y1, a_y2 = _corners(px, py, aw, ah)
    inter = jnp.maximum(jnp.minimum(g_x2, a_x2) - jnp.maximum(g_x1, a_x1), 0.0) * \
            jnp.maximum(jnp.minimum(g_y2, a_y2) - jnp.maximum(g_y1, a_y1), 0.0)
    w2 = a_x2 - a_x1
    h2 = a_y2 - a_y1 + EPS
    iou_ref[...] = inter / (gt_w * gt_h + w2 * h2 - inter + EPS)

    # ---- SIoU: box1 = decoded prediction, box2 = gt ----
    b1x = jnp.tanh(dx) + px
    b1y = jnp.tanh(dy) + py
    b1w = jnp.exp(dw) * aw
    b1h = jnp.exp(dh) * ah
    b1x1, b1x2, b1y1, b1y2 = _corners(b1x, b1y, b1w, b1h)

    inter_s = jnp.maximum(jnp.minimum(b1x2, g_x2) - jnp.maximum(b1x1, g_x1), 0.0) * \
              jnp.maximum(jnp.minimum(b1y2, g_y2) - jnp.maximum(b1y1, g_y1), 0.0)
    sw1 = b1x2 - b1x1
    sh1 = b1y2 - b1y1 + EPS
    sw2 = gt_w
    sh2 = gt_h
    union_s = sw1 * sh1 + sw2 * sh2 - inter_s + EPS
    iou_s = inter_s * pl.reciprocal(union_s, approx=True)

    cw = jnp.maximum(b1x2, g_x2) - jnp.minimum(b1x1, g_x1)
    ch = jnp.maximum(b1y2, g_y2) - jnp.minimum(b1y1, g_y1)
    s_cw = (g_x1 + g_x2 - b1x1 - b1x2) * 0.5
    s_ch = (g_y1 + g_y2 - b1y1 - b1y2) * 0.5
    # one rsqrt shared by both sin terms (coincident centers -> no NaN thanks to +EPS)
    inv_sigma = jax.lax.rsqrt(s_cw * s_cw + s_ch * s_ch + EPS)
    sin_a1 = jnp.abs(s_cw) * inv_sigma
    sin_a2 = jnp.abs(s_ch) * inv_sigma
    threshold = 0.7071067811865476  # sqrt(2)/2
    sin_a = jnp.where(sin_a1 > threshold, sin_a2, sin_a1)
    # cos(2*arcsin(s) - pi/2) == 2*s*sqrt(1 - s^2)  (avoids arcsin/cos)
    angle_cost = 2.0 * sin_a * jnp.sqrt(jnp.maximum(1.0 - sin_a * sin_a, 0.0))
    rx = s_cw * pl.reciprocal(cw + EPS, approx=True)
    ry = s_ch * pl.reciprocal(ch + EPS, approx=True)
    gamma = angle_cost - 2.0
    distance_cost = 2.0 - jnp.exp(gamma * rx * rx) - jnp.exp(gamma * ry * ry)
    omiga_w = jnp.abs(sw1 - sw2) * pl.reciprocal(jnp.maximum(sw1, sw2) + EPS, approx=True)
    omiga_h = jnp.abs(sh1 - sh2) * pl.reciprocal(jnp.maximum(sh1, sh2) + EPS, approx=True)
    tw = 1.0 - jnp.exp(-omiga_w)
    th = 1.0 - jnp.exp(-omiga_h)
    tw2 = tw * tw
    th2 = th * th
    shape_cost = tw2 * tw2 + th2 * th2     # pow(., 4) as explicit square-of-square
    siou_ref[...] = iou_s - 0.5 * (distance_cost + shape_cost)


def _obj_kernel(obj_ref, out_ref):
    """Per-tile partial sum of SmoothL1(pred_obj, 0) * 0.75 (the negative baseline).

    Output is a lane-dense (8, 128) partial block per grid step so the grid can be
    fully 'parallel' (both TensorCores on v7x); the tiny final reduce happens in glue.
    """
    x = obj_ref[...]
    ax = jnp.abs(x)
    sl1 = jnp.where(ax < 1.0, 0.5 * x * x, ax - 0.5)
    tr = sl1.shape[0]
    # (tr, 128) -> (tr//8, 8, 128) keeps each (8,128) vreg intact: VALU-only reduce.
    out_ref[...] = jnp.sum(sl1.reshape(tr // 8, 8, 128), axis=0) * 0.75


# ----------------------------- pallas_call wrappers -----------------------------

def pallas_box(packed, tile_sub):
    n_fields, sp, _ = packed.shape
    grid_c = sp // tile_sub
    out = jax.ShapeDtypeStruct((sp, 128), jnp.float32)
    return pl.pallas_call(
        _box_kernel,
        out_shape=(out, out),
        grid=(grid_c,),
        in_specs=[pl.BlockSpec((n_fields, tile_sub, 128), lambda i: (0, i, 0))],
        out_specs=(pl.BlockSpec((tile_sub, 128), lambda i: (i, 0)),
                   pl.BlockSpec((tile_sub, 128), lambda i: (i, 0))),
        compiler_params=pltpu.CompilerParams(
            dimension_semantics=("parallel",),
            vmem_limit_bytes=VMEM_LIMIT),
    )(packed)


def pallas_obj_partials(obj2d, tile_rows):
    rows = obj2d.shape[0]
    grid_o = rows // tile_rows
    return pl.pallas_call(
        _obj_kernel,
        out_shape=jax.ShapeDtypeStruct((grid_o * 8, 128), jnp.float32),
        grid=(grid_o,),
        in_specs=[pl.BlockSpec((tile_rows, 128), lambda i: (i, 0))],
        out_specs=pl.BlockSpec((8, 128), lambda i: (i, 0)),
        compiler_params=pltpu.CompilerParams(
            dimension_semantics=("parallel",),
            vmem_limit_bytes=VMEM_LIMIT),
    )(obj2d)


# ----------------------------- DetectorLoss (JAX/Pallas) -----------------------------

class DetectorLossPallas:
    def __init__(self, anchor_sizes):
        self.anchors = jnp.asarray(anchor_sizes, dtype=jnp.float32)   # [A, 2] normalized (w, h)

    def __call__(self, preds, targets):
        pred_obj, pred_delta_box, pred_cls = preds
        B, A, H, W = pred_obj.shape
        C = pred_cls.shape[2]
        N = targets.shape[0]
        zero = jnp.zeros((), jnp.float32)
        if N == 0:
            return zero, zero, zero, zero

        anchors = self.anchors
        nA = anchors.shape[0]
        M = N * 4 * nA
        HW = H * W

        # ---------------- build_target bookkeeping (index math = glue) ----------------
        scale = jnp.array([1.0, 1.0, W, H, W, H], jnp.float32)
        gt = targets.astype(jnp.float32) * scale                      # [N, 6]
        m = jnp.arange(M)
        i_idx = m // (4 * nA)
        q_idx = (m // nA) % 4
        a_idx = (m % nA).astype(jnp.int32)
        quadrant = jnp.array([[0, 0], [1, 0], [0, 1], [1, 1]], jnp.int32)
        box_center = gt[:, 2:4].astype(jnp.int32)                     # trunc like .long()
        box_center4 = box_center[i_idx] + quadrant[q_idx]             # [M, 2] (x, y)
        anchors_px = anchors * jnp.array([W, H], jnp.float32)         # [A, 2]
        gt_rep = gt[i_idx]                                            # [M, 6]
        gt_box_all = gt_rep[:, 2:6]                                   # [M, 4]

        p_batch = gt_rep[:, 0].astype(jnp.int32)
        p_cls = gt_rep[:, 1].astype(jnp.int32)
        p_x = box_center4[:, 0]
        p_y = box_center4[:, 1]
        x_c = jnp.clip(p_x, 0, W - 1)
        y_c = jnp.clip(p_y, 0, H - 1)
        aw = anchors_px[a_idx, 0]
        ah = anchors_px[a_idx, 1]

        # ---- gather predicted deltas & target-class prob straight from NCHW (no transposes) ----
        spatial = y_c * W + x_c                                       # [M]
        base_ba = p_batch * A + a_idx                                 # [M]
        delta_flat = pred_delta_box.reshape(-1).astype(jnp.float32)
        d_base = base_ba * (4 * HW) + spatial
        d_idx = d_base[None, :] + (jnp.arange(4, dtype=jnp.int32)[:, None] * HW)
        deltas = jnp.take(delta_flat, d_idx)                          # [4, M] single fused gather

        cls_flat = pred_cls.reshape(-1).astype(jnp.float32)
        p_tgt_cls = jnp.take(cls_flat, (base_ba * C + p_cls) * HW + spatial)   # [M]

        # ---- pack candidate fields into a dense [12, Sp, 128] slab ----
        fields = jnp.concatenate([
            jnp.stack([gt_box_all[:, 0], gt_box_all[:, 1], gt_box_all[:, 2], gt_box_all[:, 3],
                       p_x.astype(jnp.float32), p_y.astype(jnp.float32),
                       aw, ah], axis=0),
            deltas], axis=0).astype(jnp.float32)                      # [12, M]
        sp0 = _cdiv(M, 128)
        if sp0 <= 8:
            tile_c = _round_up(sp0, 8)                                # tiny problem: one tile
        else:
            tile_c = min(64, _round_up(_cdiv(sp0, 2), 8))             # >=2 grid steps (megacore)
        sp = _cdiv(sp0, tile_c) * tile_c
        mpad = sp * 128
        packed = jnp.pad(fields, ((0, 0), (0, mpad - M))).reshape(12, sp, 128)

        iou_pad, siou_pad = pallas_box(packed, tile_c)                # each [sp, 128]
        iou_all = iou_pad.reshape(-1)[:M]
        siou_all = siou_pad.reshape(-1)[:M]

        # ---- positive-candidate selection (per-gt argmax fallback + bounds check) ----
        iou_2d = iou_all.reshape(N, 4 * nA)
        iou_mask = iou_2d > 0.7
        no_gt = jnp.logical_not(jnp.any(iou_mask, axis=1))
        row_argmax = jnp.argmax(iou_2d, axis=1)
        fallback = no_gt[:, None] & (jnp.arange(4 * nA)[None, :] == row_argmax[:, None])
        iou_mask = (iou_mask | fallback).reshape(-1)
        wh = jnp.array([W, H], jnp.int32)
        in_bound = jnp.all((box_center4 < wh[None, :]) & (box_center4 >= 0), axis=1)
        pos_mask = iou_mask & in_bound                                # [M]
        posf = pos_mask.astype(jnp.float32)

        # ---- candidate-slab reductions (M elements: tiny, stay in glue) ----
        n_pos = jnp.maximum(jnp.sum(posf), 1.0)
        iou_loss = jnp.sum(jnp.where(pos_mask, 1.0 - siou_all, 0.0)) / n_pos
        cls_loss = jnp.sum(jnp.where(pos_mask, -jnp.log(p_tgt_cls), 0.0)) / n_pos

        # ---- objectness loss: dense baseline (Pallas, single HBM stream) + M-positive
        #      correction (glue) instead of T-sized target_obj / factor scatters ----
        # TODO(synk): duplicate positive indices would double-count in the correction; the
        # PyTorch sequential last-write semantics for duplicates is not reproduced bit-exactly.
        T = B * A * HW
        obj_flat = pred_obj.reshape(-1).astype(jnp.float32)

        rows0 = _cdiv(T, 128)
        tile_r = min(_round_up(rows0, 8), 2048)                       # <=2 MiB double-buffered
        rows = _cdiv(rows0, tile_r) * tile_r
        obj2d = jnp.pad(obj_flat, (0, rows * 128 - T)).reshape(rows, 128)  # pad 0: SmoothL1(0,0)=0
        obj_base_sum = jnp.sum(pallas_obj_partials(obj2d, tile_r))

        obj_idx = base_ba * HW + spatial                              # [M] flat NCHW index
        obj_at = jnp.take(obj_flat, obj_idx)
        counts = jnp.zeros((B,), jnp.float32).at[p_batch].add(posf)
        fac_val = HW / jnp.maximum(counts[p_batch], 1.0) * 0.25

        def _sl1(d):
            ad = jnp.abs(d)
            return jnp.where(ad < 1.0, 0.5 * d * d, ad - 0.5)

        corr = jnp.where(pos_mask,
                         _sl1(obj_at - siou_all) * fac_val - _sl1(obj_at) * 0.75,
                         0.0)
        obj_loss = (obj_base_sum + jnp.sum(corr)) / T

        tot_loss = iou_loss + obj_loss * 4.0 + cls_loss * 2.0
        return iou_loss, obj_loss, cls_loss, tot_loss


# ----------------------------- demo -----------------------------

if __name__ == "__main__":
    key = jax.random.PRNGKey(0)
    B, A, C, H, W = 2, 3, 5, 16, 16
    k1, k2, k3 = jax.random.split(key, 3)
    pred_obj = jax.random.normal(k1, (B, A, H, W), jnp.float32)
    pred_delta_box = 0.1 * jax.random.normal(k2, (B, A, 4, H, W), jnp.float32)
    pred_cls = jax.nn.softmax(
        jax.random.normal(k3, (B, A, C, H, W), jnp.float32), axis=2)

    anchor_sizes = [[0.10, 0.13], [0.30, 0.25], [0.55, 0.60]]
    # targets: [batch_idx, class_id, cx, cy, w, h] (normalized to [0, 1])
    targets = jnp.array([
        [0.0, 1.0, 0.25, 0.40, 0.20, 0.30],
        [0.0, 3.0, 0.70, 0.65, 0.35, 0.28],
        [1.0, 0.0, 0.50, 0.30, 0.55, 0.60],
    ], jnp.float32)

    loss_fn = DetectorLossPallas(anchor_sizes)
    loss_jit = jax.jit(lambda preds, t: loss_fn(preds, t))
    iou_loss, obj_loss, cls_loss, tot_loss = loss_jit(
        (pred_obj, pred_delta_box, pred_cls), targets)
    jax.block_until_ready(tot_loss)
    print("KERNEL_OK")
</pallas_src>

<mosaic_0001>
module attributes {stable_mosaic.version = 11 : i64} {
  func.func @_obj_kernel(%arg0: i32, %arg1: memref<16x128xf32, #tpu.memory_space<vmem>>, %arg2: memref<8x128xf32, #tpu.memory_space<vmem>>) attributes {dimension_semantics = [#tpu.dimension_semantics<parallel>], iteration_bounds = array<i64: 1>, scalar_prefetch = 0 : i64, scratch_operands = 0 : i64, tpu.core_type = #tpu.core_type<tc>, window_params = [{transform_indices = @transform_0, window_bounds = array<i64: 16, 128>}, {transform_indices = @transform_1, window_bounds = array<i64: 8, 128>}]} {
    %c0 = arith.constant 0 : index
    %c0_0 = arith.constant 0 : index
    %0 = vector.load %arg1[%c0, %c0_0] : memref<16x128xf32, #tpu.memory_space<vmem>>, vector<16x128xf32>
    %1 = math.absf %0 : vector<16x128xf32>
    %cst = arith.constant 1.000000e+00 : f32
    %2 = vector.broadcast %cst : f32 to vector<16x128xf32>
    %3 = arith.cmpf olt, %1, %2 : vector<16x128xf32>
    %cst_1 = arith.constant 5.000000e-01 : f32
    %4 = vector.broadcast %cst_1 : f32 to vector<16x128xf32>
    %5 = arith.mulf %4, %0 : vector<16x128xf32>
    %6 = arith.mulf %5, %0 : vector<16x128xf32>
    %cst_2 = arith.constant 5.000000e-01 : f32
    %7 = vector.broadcast %cst_2 : f32 to vector<16x128xf32>
    %8 = arith.subf %1, %7 : vector<16x128xf32>
    %9 = arith.select %3, %6, %8 : vector<16x128xi1>, vector<16x128xf32>
    %10 = vector.shape_cast %9 : vector<16x128xf32> to vector<2x8x128xf32>
    %cst_3 = arith.constant dense<0.000000e+00> : vector<8x128xf32>
    %11 = vector.multi_reduction <add>, %10, %cst_3 [0] : vector<2x8x128xf32> to vector<8x128xf32>
    %cst_4 = arith.constant 7.500000e-01 : f32
    %12 = vector.broadcast %cst_4 : f32 to vector<8x128xf32>
    %13 = arith.mulf %11, %12 : vector<8x128xf32>
    %c0_5 = arith.constant 0 : index
    %c0_6 = arith.constant 0 : index
    %14 = vector.load %arg2[%c0_5, %c0_6] : memref<8x128xf32, #tpu.memory_space<vmem>>, vector<8x128xf32>
    tpu.vector_store %arg2[%c0_5, %c0_6], %13 {strides = array<i32>} : memref<8x128xf32, #tpu.memory_space<vmem>>, vector<8x128xf32>,
    return
  }
  func.func @transform_0(%arg0: i32) -> (i32, i32) {
    %c0_i32 = arith.constant 0 : i32
    %c0_i32_0 = arith.constant 0 : i32
    return %arg0, %c0_i32 : i32, i32
  }
  func.func @transform_1(%arg0: i32) -> (i32, i32) {
    %c0_i32 = arith.constant 0 : i32
    %c0_i32_0 = arith.constant 0 : i32
    return %arg0, %c0_i32 : i32, i32
  }
}

module attributes {stable_mosaic.version = 11 : i64} {
  func.func @_box_kernel(%arg0: i32, %arg1: memref<12x8x128xf32, #tpu.memory_space<vmem>>, %arg2: memref<8x128xf32, #tpu.memory_space<vmem>>, %arg3: memref<8x128xf32, #tpu.memory_space<vmem>>) attributes {dimension_semantics = [#tpu.dimension_semantics<parallel>], iteration_bounds = array<i64: 1>, scalar_prefetch = 0 : i64, scratch_operands = 0 : i64, tpu.core_type = #tpu.core_type<tc>, window_params = [{transform_indices = @transform_0, window_bounds = array<i64: 12, 8, 128>}, {transform_indices = @transform_1, window_bounds = array<i64: 8, 128>}, {transform_indices = @transform_2, window_bounds = array<i64: 8, 128>}]} {
    %c0 = arith.constant 0 : index
    %c0_0 = arith.constant 0 : index
    %c0_1 = arith.constant 0 : index
    %0 = vector.load %arg1[%c0, %c0_0, %c0_1] : memref<12x8x128xf32, #tpu.memory_space<vmem>>, vector<1x8x128xf32>
    %1 = vector.shape_cast %0 : vector<1x8x128xf32> to vector<8x128xf32>
    %c1 = arith.constant 1 : index
    %c0_2 = arith.constant 0 : index
    %c0_3 = arith.constant 0 : index
    %2 = vector.load %arg1[%c1, %c0_2, %c0_3] : memref<12x8x128xf32, #tpu.memory_space<vmem>>, vector<1x8x128xf32>
    %3 = vector.shape_cast %2 : vector<1x8x128xf32> to vector<8x128xf32>
    %c2 = arith.constant 2 : index
    %c0_4 = arith.constant 0 : index
    %c0_5 = arith.constant 0 : index
    %4 = vector.load %arg1[%c2, %c0_4, %c0_5] : memref<12x8x128xf32, #tpu.memory_space<vmem>>, vector<1x8x128xf32>
    %5 = vector.shape_cast %4 : vector<1x8x128xf32> to vector<8x128xf32>
    %c3 = arith.constant 3 : index
    %c0_6 = arith.constant 0 : index
    %c0_7 = arith.constant 0 : index
    %6 = vector.load %arg1[%c3, %c0_6, %c0_7] : memref<12x8x128xf32, #tpu.memory_space<vmem>>, vector<1x8x128xf32>
    %7 = vector.shape_cast %6 : vector<1x8x128xf32> to vector<8x128xf32>
    %c4 = arith.constant 4 : index
    %c0_8 = arith.constant 0 : index
    %c0_9 = arith.constant 0 : index
    %8 = vector.load %arg1[%c4, %c0_8, %c0_9] : memref<12x8x128xf32, #tpu.memory_space<vmem>>, vector<1x8x128xf32>
    %9 = vector.shape_cast %8 : vector<1x8x128xf32> to vector<8x128xf32>
    %c5 = arith.constant 5 : index
    %c0_10 = arith.constant 0 : index
    %c0_11 = arith.constant 0 : index
    %10 = vector.load %arg1[%c5, %c0_10, %c0_11] : memref<12x8x128xf32, #tpu.memory_space<vmem>>, vector<1x8x128xf32>
    %11 = vector.shape_cast %10 : vector<1x8x128xf32> to vector<8x128xf32>
    %c6 = arith.constant 6 : index
    %c0_12 = arith.constant 0 : index
    %c0_13 = arith.constant 0 : index
    %12 = vector.load %arg1[%c6, %c0_12, %c0_13] : memref<12x8x128xf32, #tpu.memory_space<vmem>>, vector<1x8x128xf32>
    %13 = vector.shape_cast %12 : vector<1x8x128xf32> to vector<8x128xf32>
    %c7 = arith.constant 7 : index
    %c0_14 = arith.constant 0 : index
    %c0_15 = arith.constant 0 : index
    %14 = vector.load %arg1[%c7, %c0_14, %c0_15] : memref<12x8x128xf32, #tpu.memory_space<vmem>>, vector<1x8x128xf32>
    %15 = vector.shape_cast %14 : vector<1x8x128xf32> to vector<8x128xf32>
    %c8 = arith.constant 8 : index
    %c0_16 = arith.constant 0 : index
    %c0_17 = arith.constant 0 : index
    %16 = vector.load %arg1[%c8, %c0_16, %c0_17] : memref<12x8x128xf32, #tpu.memory_space<vmem>>, vector<1x8x128xf32>
    %17 = vector.shape_cast %16 : vector<1x8x128xf32> to vector<8x128xf32>
    %c9 = arith.constant 9 : index
    %c0_18 = arith.constant 0 : index
    %c0_19 = arith.constant 0 : index
    %18 = vector.load %arg1[%c9, %c0_18, %c0_19] : memref<12x8x128xf32, #tpu.memory_space<vmem>>, vector<1x8x128xf32>
    %19 = vector.shape_cast %18 : vector<1x8x128xf32> to vector<8x128xf32>
    %c10 = arith.constant 10 : index
    %c0_20 = arith.constant 0 : index
    %c0_21 = arith.constant 0 : index
    %20 = vector.load %arg1[%c10, %c0_20, %c0_21] : memref<12x8x128xf32, #tpu.memory_space<vmem>>, vector<1x8x128xf32>
    %21 = vector.shape_cast %20 : vector<1x8x128xf32> to vector<8x128xf32>
    %c11 = arith.constant 11 : index
    %c0_22 = arith.constant 0 : index
    %c0_23 = arith.constant 0 : index
    %22 = vector.load %arg1[%c11, %c0_22, %c0_23] : memref<12x8x128xf32, #tpu.memory_space<vmem>>, vector<1x8x128xf32>
    %23 = vector.shape_cast %22 : vector<1x8x128xf32> to vector<8x128xf32>
    %cst = arith.constant 5.000000e-01 : f32
    %24 = vector.broadcast %cst : f32 to vector<8x128xf32>
    %25 = arith.mulf %5, %24 : vector<8x128xf32>
    %cst_24 = arith.constant 5.000000e-01 : f32
    %26 = vector.broadcast %cst_24 : f32 to vector<8x128xf32>
    %27 = arith.mulf %7, %26 : vector<8x128xf32>
    %28 = arith.subf %1, %25 : vector<8x128xf32>
    %29 = arith.addf %1, %25 : vector<8x128xf32>
    %30 = arith.subf %3, %27 : vector<8x128xf32>
    %31 = arith.addf %3, %27 : vector<8x128xf32>
    %32 = arith.subf %29, %28 : vector<8x128xf32>
    %33 = arith.subf %31, %30 : vector<8x128xf32>
    %cst_25 = arith.constant 1.000000e-07 : f32
    %34 = vector.broadcast %cst_25 : f32 to vector<8x128xf32>
    %35 = arith.addf %33, %34 : vector<8x128xf32>
    %cst_26 = arith.constant 5.000000e-01 : f32
    %36 = vector.broadcast %cst_26 : f32 to vector<8x128xf32>
    %37 = arith.mulf %13, %36 : vector<8x128xf32>
    %cst_27 = arith.constant 5.000000e-01 : f32
    %38 = vector.broadcast %cst_27 : f32 to vector<8x128xf32>
    %39 = arith.mulf %15, %38 : vector<8x128xf32>
    %40 = arith.subf %9, %37 : vector<8x128xf32>
    %41 = arith.addf %9, %37 : vector<8x128xf32>
    %42 = arith.subf %11, %39 : vector<8x128xf32>
    %43 = arith.addf %11, %39 : vector<8x128xf32>
    %44 = arith.minimumf %29, %41 : vector<8x128xf32>
    %45 = arith.maximumf %28, %40 : vector<8x128xf32>
    %46 = arith.subf %44, %45 : vector<8x128xf32>
    %cst_28 = arith.constant 0.000000e+00 : f32
    %47 = vector.broadcast %cst_28 : f32 to vector<8x128xf32>
    %48 = arith.maximumf %46, %47 : vector<8x128xf32>
    %49 = arith.minimumf %31, %43 : vector<8x128xf32>
    %50 = arith.maximumf %30, %42 : vector<8x128xf32>
    %51 = arith.subf %49, %50 : vector<8x128xf32>
    %cst_29 = arith.constant 0.000000e+00 : f32
    %52 = vector.broadcast %cst_29 : f32 to vector<8x128xf32>
    %53 = arith.maximumf %51, %52 : vector<8x128xf32>
    %54 = arith.mulf %48, %53 : vector<8x128xf32>
    %55 = arith.subf %41, %40 : vector<8x128xf32>
    %56 = arith.subf %43, %42 : vector<8x128xf32>
    %cst_30 = arith.constant 1.000000e-07 : f32
    %57 = vector.broadcast %cst_30 : f32 to vector<8x128xf32>
    %58 = arith.addf %56, %57 : vector<8x128xf32>
    %59 = arith.mulf %32, %35 : vector<8x128xf32>
    %60 = arith.mulf %55, %58 : vector<8x128xf32>
    %61 = arith.addf %59, %60 : vector<8x128xf32>
    %62 = arith.subf %61, %54 : vector<8x128xf32>
    %cst_31 = arith.constant 1.000000e-07 : f32
    %63 = vector.broadcast %cst_31 : f32 to vector<8x128xf32>
    %64 = arith.addf %62, %63 : vector<8x128xf32>
    %65 = arith.divf %54, %64 : vector<8x128xf32>
    %c0_32 = arith.constant 0 : index
    %c0_33 = arith.constant 0 : index
    %66 = vector.load %arg2[%c0_32, %c0_33] : memref<8x128xf32, #tpu.memory_space<vmem>>, vector<8x128xf32>
    tpu.vector_store %arg2[%c0_32, %c0_33], %65 {strides = array<i32>} : memref<8x128xf32, #tpu.memory_space<vmem>>, vector<8x128xf32>,
    %67 = math.tanh %17 : vector<8x128xf32>
    %68 = arith.addf %67, %9 : vector<8x128xf32>
    %69 = math.tanh %19 : vector<8x128xf32>
    %70 = arith.addf %69, %11 : vector<8x128xf32>
    %71 = math.exp %21 : vector<8x128xf32>
    %72 = arith.mulf %71, %13 : vector<8x128xf32>
    %73 = math.exp %23 : vector<8x128xf32>
    %74 = arith.mulf %73, %15 : vector<8x128xf32>
    %cst_34 = arith.constant 5.000000e-01 : f32
    %75 = vector.broadcast %cst_34 : f32 to vector<8x128xf32>
    %76 = arith.mulf %72, %75 : vector<8x128xf32>
    %cst_35 = arith.constant 5.000000e-01 : f32
    %77 = vector.broadcast %cst_35 : f32 to vector<8x128xf32>
    %78 = arith.mulf %74, %77 : vector<8x128xf32>
    %79 = arith.subf %68, %76 : vector<8x128xf32>
    %80 = arith.addf %68, %76 : vector<8x128xf32>
    %81 = arith.subf %70, %78 : vector<8x128xf32>
    %82 = arith.addf %70, %78 : vector<8x128xf32>
    %83 = arith.minimumf %80, %29 : vector<8x128xf32>
    %84 = arith.maximumf %79, %28 : vector<8x128xf32>
    %85 = arith.subf %83, %84 : vector<8x128xf32>
    %cst_36 = arith.constant 0.000000e+00 : f32
    %86 = vector.broadcast %cst_36 : f32 to vector<8x128xf32>
    %87 = arith.maximumf %85, %86 : vector<8x128xf32>
    %88 = arith.minimumf %82, %31 : vector<8x128xf32>
    %89 = arith.maximumf %81, %30 : vector<8x128xf32>
    %90 = arith.subf %88, %89 : vector<8x128xf32>
    %cst_37 = arith.constant 0.000000e+00 : f32
    %91 = vector.broadcast %cst_37 : f32 to vector<8x128xf32>
    %92 = arith.maximumf %90, %91 : vector<8x128xf32>
    %93 = arith.mulf %87, %92 : vector<8x128xf32>
    %94 = arith.subf %80, %79 : vector<8x128xf32>
    %95 = arith.subf %82, %81 : vector<8x128xf32>
    %cst_38 = arith.constant 1.000000e-07 : f32
    %96 = vector.broadcast %cst_38 : f32 to vector<8x128xf32>
    %97 = arith.addf %95, %96 : vector<8x128xf32>
    %98 = arith.mulf %94, %97 : vector<8x128xf32>
    %99 = arith.mulf %32, %35 : vector<8x128xf32>
    %100 = arith.addf %98, %99 : vector<8x128xf32>
    %101 = arith.subf %100, %93 : vector<8x128xf32>
    %cst_39 = arith.constant 1.000000e-07 : f32
    %102 = vector.broadcast %cst_39 : f32 to vector<8x128xf32>
    %103 = arith.addf %101, %102 : vector<8x128xf32>
    %104 = tpu.reciprocal %103 {approx = true} : vector<8x128xf32> -> vector<8x128xf32>
    %105 = arith.mulf %93, %104 : vector<8x128xf32>
    %106 = arith.maximumf %80, %29 : vector<8x128xf32>
    %107 = arith.minimumf %79, %28 : vector<8x128xf32>
    %108 = arith.subf %106, %107 : vector<8x128xf32>
    %109 = arith.maximumf %82, %31 : vector<8x128xf32>
    %110 = arith.minimumf %81, %30 : vector<8x128xf32>
    %111 = arith.subf %109, %110 : vector<8x128xf32>
    %112 = arith.addf %28, %29 : vector<8x128xf32>
    %113 = arith.subf %112, %79 : vector<8x128xf32>
    %114 = arith.subf %113, %80 : vector<8x128xf32>
    %cst_40 = arith.constant 5.000000e-01 : f32
    %115 = vector.broadcast %cst_40 : f32 to vector<8x128xf32>
    %116 = arith.mulf %114, %115 : vector<8x128xf32>
    %117 = arith.addf %30, %31 : vector<8x128xf32>
    %118 = arith.subf %117, %81 : vector<8x128xf32>
    %119 = arith.subf %118, %82 : vector<8x128xf32>
    %cst_41 = arith.constant 5.000000e-01 : f32
    %120 = vector.broadcast %cst_41 : f32 to vector<8x128xf32>
    %121 = arith.mulf %119, %120 : vector<8x128xf32>
    %122 = arith.mulf %116, %116 : vector<8x128xf32>
    %123 = arith.mulf %121, %121 : vector<8x128xf32>
    %124 = arith.addf %122, %123 : vector<8x128xf32>
    %cst_42 = arith.constant 1.000000e-07 : f32
    %125 = vector.broadcast %cst_42 : f32 to vector<8x128xf32>
    %126 = arith.addf %124, %125 : vector<8x128xf32>
    %127 = math.rsqrt %126 : vector<8x128xf32>
    %128 = math.absf %116 : vector<8x128xf32>
    %129 = arith.mulf %128, %127 : vector<8x128xf32>
    %130 = math.absf %121 : vector<8x128xf32>
    %131 = arith.mulf %130, %127 : vector<8x128xf32>
    %cst_43 = arith.constant 0.707106769 : f32
    %132 = vector.broadcast %cst_43 : f32 to vector<8x128xf32>
    %133 = arith.cmpf ogt, %129, %132 : vector<8x128xf32>
    %134 = arith.select %133, %131, %129 : vector<8x128xi1>, vector<8x128xf32>
    %cst_44 = arith.constant 2.000000e+00 : f32
    %135 = vector.broadcast %cst_44 : f32 to vector<8x128xf32>
    %136 = arith.mulf %135, %134 : vector<8x128xf32>
    %137 = arith.mulf %134, %134 : vector<8x128xf32>
    %cst_45 = arith.constant 1.000000e+00 : f32
    %138 = vector.broadcast %cst_45 : f32 to vector<8x128xf32>
    %139 = arith.subf %138, %137 : vector<8x128xf32>
    %cst_46 = arith.constant 0.000000e+00 : f32
    %140 = vector.broadcast %cst_46 : f32 to vector<8x128xf32>
    %141 = arith.maximumf %139, %140 : vector<8x128xf32>
    %142 = math.sqrt %141 : vector<8x128xf32>
    %143 = arith.mulf %136, %142 : vector<8x128xf32>
    %cst_47 = arith.constant 1.000000e-07 : f32
    %144 = vector.broadcast %cst_47 : f32 to vector<8x128xf32>
    %145 = arith.addf %108, %144 : vector<8x128xf32>
    %146 = tpu.reciprocal %145 {approx = true} : vector<8x128xf32> -> vector<8x128xf32>
    %147 = arith.mulf %116, %146 : vector<8x128xf32>
    %cst_48 = arith.constant 1.000000e-07 : f32
    %148 = vector.broadcast %cst_48 : f32 to vector<8x128xf32>
    %149 = arith.addf %111, %148 : vector<8x128xf32>
    %150 = tpu.reciprocal %149 {approx = true} : vector<8x128xf32> -> vector<8x128xf32>
    %151 = arith.mulf %121, %150 : vector<8x128xf32>
    %cst_49 = arith.constant 2.000000e+00 : f32
    %152 = vector.broadcast %cst_49 : f32 to vector<8x128xf32>
    %153 = arith.subf %143, %152 : vector<8x128xf32>
    %154 = arith.mulf %153, %147 : vector<8x128xf32>
    %155 = arith.mulf %154, %147 : vector<8x128xf32>
    %156 = math.exp %155 : vector<8x128xf32>
    %cst_50 = arith.constant 2.000000e+00 : f32
    %157 = vector.broadcast %cst_50 : f32 to vector<8x128xf32>
    %158 = arith.subf %157, %156 : vector<8x128xf32>
    %159 = arith.mulf %153, %151 : vector<8x128xf32>
    %160 = arith.mulf %159, %151 : vector<8x128xf32>
    %161 = math.exp %160 : vector<8x128xf32>
    %162 = arith.subf %158, %161 : vector<8x128xf32>
    %163 = arith.subf %94, %32 : vector<8x128xf32>
    %164 = math.absf %163 : vector<8x128xf32>
    %165 = arith.maximumf %94, %32 : vector<8x128xf32>
    %cst_51 = arith.constant 1.000000e-07 : f32
    %166 = vector.broadcast %cst_51 : f32 to vector<8x128xf32>
    %167 = arith.addf %165, %166 : vector<8x128xf32>
    %168 = tpu.reciprocal %167 {approx = true} : vector<8x128xf32> -> vector<8x128xf32>
    %169 = arith.mulf %164, %168 : vector<8x128xf32>
    %170 = arith.subf %97, %35 : vector<8x128xf32>
    %171 = math.absf %170 : vector<8x128xf32>
    %172 = arith.maximumf %97, %35 : vector<8x128xf32>
    %cst_52 = arith.constant 1.000000e-07 : f32
    %173 = vector.broadcast %cst_52 : f32 to vector<8x128xf32>
    %174 = arith.addf %172, %173 : vector<8x128xf32>
    %175 = tpu.reciprocal %174 {approx = true} : vector<8x128xf32> -> vector<8x128xf32>
    %176 = arith.mulf %171, %175 : vector<8x128xf32>
    %cst_53 = arith.constant 0.000000e+00 : f32
    %177 = vector.broadcast %cst_53 : f32 to vector<8x128xf32>
    %178 = arith.subf %177, %169 : vector<8x128xf32>
    %179 = math.exp %178 : vector<8x128xf32>
    %cst_54 = arith.constant 1.000000e+00 : f32
    %180 = vector.broadcast %cst_54 : f32 to vector<8x128xf32>
    %181 = arith.subf %180, %179 : vector<8x128xf32>
    %cst_55 = arith.constant 0.000000e+00 : f32
    %182 = vector.broadcast %cst_55 : f32 to vector<8x128xf32>
    %183 = arith.subf %182, %176 : vector<8x128xf32>
    %184 = math.exp %183 : vector<8x128xf32>
    %cst_56 = arith.constant 1.000000e+00 : f32
    %185 = vector.broadcast %cst_56 : f32 to vector<8x128xf32>
    %186 = arith.subf %185, %184 : vector<8x128xf32>
    %187 = arith.mulf %181, %181 : vector<8x128xf32>
    %188 = arith.mulf %186, %186 : vector<8x128xf32>
    %189 = arith.mulf %187, %187 : vector<8x128xf32>
    %190 = arith.mulf %188, %188 : vector<8x128xf32>
    %191 = arith.addf %189, %190 : vector<8x128xf32>
    %192 = arith.addf %162, %191 : vector<8x128xf32>
    %cst_57 = arith.constant 5.000000e-01 : f32
    %193 = vector.broadcast %cst_57 : f32 to vector<8x128xf32>
    %194 = arith.mulf %193, %192 : vector<8x128xf32>
    %195 = arith.subf %105, %194 : vector<8x128xf32>
    %c0_58 = arith.constant 0 : index
    %c0_59 = arith.constant 0 : index
    %196 = vector.load %arg3[%c0_58, %c0_59] : memref<8x128xf32, #tpu.memory_space<vmem>>, vector<8x128xf32>
    tpu.vector_store %arg3[%c0_58, %c0_59], %195 {strides = array<i32>} : memref<8x128xf32, #tpu.memory_space<vmem>>, vector<8x128xf32>,
    return
  }
  func.func @transform_0(%arg0: i32) -> (i32, i32, i32) {
    %c0_i32 = arith.constant 0 : i32
    %c0_i32_0 = arith.constant 0 : i32
    %c0_i32_1 = arith.constant 0 : i32
    return %c0_i32, %arg0, %c0_i32_0 : i32, i32, i32
  }
  func.func @transform_1(%arg0: i32) -> (i32, i32) {
    %c0_i32 = arith.constant 0 : i32
    %c0_i32_0 = arith.constant 0 : i32
    return %arg0, %c0_i32 : i32, i32
  }
  func.func @transform_2(%arg0: i32) -> (i32, i32) {
    %c0_i32 = arith.constant 0 : i32
    %c0_i32_0 = arith.constant 0 : i32
    return %arg0, %c0_i32 : i32, i32
  }
}

</mosaic_0001>

<llo_original>
// kernel: _lambda_.3
$region0: #{_lambda_.3}
  #allocation0 [shape = 'u32[]', space=smem, size = 0x4, offset = 0x4, fixed_abs, tag = 'smem constant byte address 0x4 - core index']
  #allocation1 [shape = 'u32[72,128]{1,0:T(1,128)}', space=vmem, size = 0x9000, scoped, tag = 'internal scratch']
  %s0 = inlined_call_operand.vmem [shape: f32[16,128], index: 0, kind: input, shape index: {}]
  %s1 = inlined_call_operand.vmem [shape: f32[8,128], index: 1, kind: output, shape index: {}]
  %s2 = sld [smem:[#allocation0]]
  $region14: #{_lambda_.3} parent=0
    _
  %s4 = ssub.s32 1, %s2
  %s5 = scalar_select 0, %s4, %s2
  // Predicated region
  $region2: #{_lambda_.3} parent=0 // pred_check
    _
  $region3: #{_lambda_.3} parent=0 // pred_check_branch
    %7 = sbr.rel (0) target = $region5
  $region4: #{_lambda_.3} parent=0 // pred_region
    _
  $region5: #{_lambda_.3} parent=0 // pred_fallthru
    _
  %v8 = vld [vmem:[%s0] sm:$0xff]
  %v9 = vld [vmem:[%s0 + $0x8] sm:$0xff]
  %v10 = vand.u32 2147483647, %v8
  %v11 = vand.u32 2147483647, %v9
  %vm12 = vcmp.lt.f32.partialorder %v10, 1.0
  %vm13 = vcmp.lt.f32.partialorder %v11, 1.0
  %v14 = vmul.f32 %v8, 0.5
  %v15 = vmul.f32 %v9, 0.5
  %v16 = vmul.f32 %v14, %v8
  %v17 = vmul.f32 %v15, %v9
  %v18 = vsub.f32 %v10, 0.5
  %v19 = vsub.f32 %v11, 0.5
  %v20 = vsel %vm12, %v16, %v18
  %v21 = vsel %vm13, %v17, %v19
  %v22 = vadd.f32 %v20, %v21
  %v23 = vmul.f32 %v22, 0.75
  %24 = vst [vmem:[%s1] sm:$0xff] %v23
  // Predicated region
  $region6: #{_lambda_.3} parent=0 // pred_check
    _
  $region7: #{_lambda_.3} parent=0 // pred_check_branch
    %26 = sbr.rel (0) target = $region9
  $region8: #{_lambda_.3} parent=0 // pred_region
    _
  $region9: #{_lambda_.3} parent=0 // pred_fallthru
    _
  // Predicated region
  $region10: #{_lambda_.3} parent=0 // pred_check
    _
  $region11: #{_lambda_.3} parent=0 // pred_check_branch
    %28 = sbr.rel (0) target = $region13
  $region12: #{_lambda_.3} parent=0 // pred_region
    _
  $region13: #{_lambda_.3} parent=0 // pred_fallthru
    _

// kernel: _lambda_.2
$region0: #{_lambda_.2}
  #allocation0 [shape = 'u32[]', space=smem, size = 0x4, offset = 0x4, fixed_abs, tag = 'smem constant byte address 0x4 - core index']
  #allocation1 [shape = 'u32[72,128]{1,0:T(1,128)}', space=vmem, size = 0x9000, scoped, tag = 'internal scratch']
  %s0 = inlined_call_operand.vmem [shape: f32[12,8,128], index: 0, kind: input, shape index: {}]
  %s1 = inlined_call_operand.vmem [shape: f32[8,128], index: 1, kind: output, shape index: {0}]
  %s2 = inlined_call_operand.vmem [shape: f32[8,128], index: 2, kind: output, shape index: {1}]
  %3 = xla_tuple %s1, %s2
  %s4 = sld [smem:[#allocation0]]
  $region22: #{_lambda_.2} parent=0
    _
  %s6 = ssub.s32 1, %s4
  %s7 = scalar_select 0, %s6, %s4
  // Predicated region
  $region2: #{_lambda_.2} parent=0 // pred_check
    _
  $region3: #{_lambda_.2} parent=0 // pred_check_branch
    %9 = sbr.rel (0) target = $region5
  $region4: #{_lambda_.2} parent=0 // pred_region
    _
  $region5: #{_lambda_.2} parent=0 // pred_fallthru
    _
  %v10 = vld [vmem:[%s0] sm:$0xff]
  %s11 = scalar_lea.vmem %s0, 8
  %v12 = vld [vmem:[%s11] sm:$0xff]
  %s13 = scalar_lea.vmem %s0, 16
  %v14 = vld [vmem:[%s13] sm:$0xff]
  %s15 = scalar_lea.vmem %s0, 24
  %v16 = vld [vmem:[%s15] sm:$0xff]
  %s17 = scalar_lea.vmem %s0, 32
  %v18 = vld [vmem:[%s17] sm:$0xff]
  %s19 = scalar_lea.vmem %s0, 40
  %v20 = vld [vmem:[%s19] sm:$0xff]
  %s21 = scalar_lea.vmem %s0, 48
  %v22 = vld [vmem:[%s21] sm:$0xff]
  %s23 = scalar_lea.vmem %s0, 56
  %v24 = vld [vmem:[%s23] sm:$0xff]
  %s25 = scalar_lea.vmem %s0, 64
  %v26 = vld [vmem:[%s25] sm:$0xff]
  %s27 = scalar_lea.vmem %s0, 72
  %v28 = vld [vmem:[%s27] sm:$0xff]
  %s29 = scalar_lea.vmem %s0, 80
  %v30 = vld [vmem:[%s29] sm:$0xff]
  %s31 = scalar_lea.vmem %s0, 88
  %v32 = vld [vmem:[%s31] sm:$0xff]
  %v33 = vmul.f32 %v14, 0.5
  %v34 = vmul.f32 %v16, 0.5
  %v35 = vsub.f32 %v10, %v33
  %v36 = vadd.f32 %v10, %v33
  %v37 = vsub.f32 %v12, %v34
  %v38 = vadd.f32 %v12, %v34
  %v39 = vsub.f32 %v36, %v35
  %v40 = vsub.f32 %v38, %v37
  %v41 = vadd.f32 %v40, 1e-07
  %v42 = vmul.f32 %v22, 0.5
  %v43 = vmul.f32 %v24, 0.5
  %v44 = vsub.f32 %v18, %v42
  %v45 = vadd.f32 %v18, %v42
  %v46 = vsub.f32 %v20, %v43
  %v47 = vadd.f32 %v20, %v43
  %v48 = vmin.f32 %v36, %v45
  %v49 = vmax.f32 %v35, %v44
  %v50 = vsub.f32 %v48, %v49
  %v51 = vmax.f32 %v50, 0.0
  %v52 = vmin.f32 %v38, %v47
  %v53 = vmax.f32 %v37, %v46
  %v54 = vsub.f32 %v52, %v53
  %v55 = vmax.f32 %v54, 0.0
  %v56 = vmul.f32 %v51, %v55
  %v57 = vsub.f32 %v45, %v44
  %v58 = vsub.f32 %v47, %v46
  %v59 = vadd.f32 %v58, 1e-07
  %v60 = vmul.f32 %v39, %v41
  %v61 = vmul.f32 %v57, %v59
  %v62 = vadd.f32 %v60, %v61
  %v63 = vsub.f32 %v62, %v56
  %v64 = vadd.f32 %v63, 1e-07
  %v65 = vrcp.pop %v64
  %v66 = vmul.f32 %v64, %v65
  %v67 = vsub.f32 1.0, %v66
  %v68 = vmul.f32 %v65, %v67
  %v69 = vadd.f32 %v65, %v68
  %vm70 = vweird.f32 %v64
  %vm71 = vweird.f32 %v65
  %vm72 = vmor %vm70, %vm71
  %v73 = vsel %vm72, %v65, %v69
  %v74 = vand.u32 2147483647, %v64
  %vm75 = vcmp.eq.f32.partialorder %v74, 8.507059e+37
  %v76 = vand.u32 %v64, 2147483648
  %v77 = vor.u32 1.1754944e-38, %v76
  %v78 = vsel %vm75, %v77, %v73
  %v79 = vmul.f32 %v56, %v78
  %80 = vst [vmem:[%s1] sm:$0xff] %v79
  %v81 = vtanh.pop %v26
  %v82 = vadd.f32 %v81, %v18
  %v83 = vtanh.pop %v28
  %v84 = vadd.f32 %v83, %v20
  %v85 = vmul.f32 %v30, 1.442695
  %v86 = vpow.pop %v85
  %v87 = vmul.f32 %v86, %v22
  %v88 = vmul.f32 %v32, 1.442695
  %v89 = vpow.pop %v88
  %v90 = vmul.f32 %v89, %v24
  %v91 = vmul.f32 %v87, 0.5
  %v92 = vmul.f32 %v90, 0.5
  %v93 = vsub.f32 %v82, %v91
  %v94 = vadd.f32 %v82, %v91
  %v95 = vsub.f32 %v84, %v92
  %v96 = vadd.f32 %v84, %v92
  %v97 = vmin.f32 %v94, %v36
  %v98 = vmax.f32 %v93, %v35
  %v99 = vsub.f32 %v97, %v98
  %v100 = vmax.f32 %v99, 0.0
  %v101 = vmin.f32 %v96, %v38
  %v102 = vmax.f32 %v95, %v37
  %v103 = vsub.f32 %v101, %v102
  %v104 = vmax.f32 %v103, 0.0
  %v105 = vmul.f32 %v100, %v104
  %v106 = vsub.f32 %v94, %v93
  %v107 = vsub.f32 %v96, %v95
  %v108 = vadd.f32 %v107, 1e-07
  %v109 = vmul.f32 %v106, %v108
  %v110 = vadd.f32 %v109, %v60
  %v111 = vsub.f32 %v110, %v105
  %v112 = vadd.f32 %v111, 1e-07
  %v113 = vrcp.pop %v112
  %v114 = vmul.f32 %v105, %v113
  %v115 = vmax.f32 %v94, %v36
  %v116 = vmin.f32 %v93, %v35
  %v117 = vsub.f32 %v115, %v116
  %v118 = vmax.f32 %v96, %v38
  %v119 = vmin.f32 %v95, %v37
  %v120 = vsub.f32 %v118, %v119
  %v121 = vadd.f32 %v35, %v36
  %v122 = vsub.f32 %v121, %v93
  %v123 = vsub.f32 %v122, %v94
  %v124 = vmul.f32 %v123, 0.5
  %v125 = vadd.f32 %v37, %v38
  %v126 = vsub.f32 %v125, %v95
  %v127 = vsub.f32 %v126, %v96
  %v128 = vmul.f32 %v127, 0.5
  %v129 = vmul.f32 %v124, %v124
  %v130 = vmul.f32 %v128, %v128
  %v131 = vadd.f32 %v129, %v130
  %v132 = vadd.f32 %v131, 1e-07
  %v133 = vrsqrt.pop %v132
  %v134 = vmul.f32 %v133, %v132
  %v135 = vmul.f32 %v134, %v133
  %v136 = vmul.f32 0.5, %v135
  %v137 = vsub.f32 1.5, %v136
  %v138 = vmul.f32 %v133, %v137
  %vm139 = vweird.f32 %v132
  %vm140 = vweird.f32 %v133
  %vm141 = vmor %vm139, %vm140
  %v142 = vsel %vm141, %v133, %v138
  %v143 = vand.u32 2147483647, %v124
  %v144 = vmul.f32 %v143, %v142
  %v145 = vand.u32 2147483647, %v128
  %v146 = vmul.f32 %v145, %v142
  %vm147 = vcmp.gt.f32.partialorder %v144, 0.70710677
  %v148 = vsel %vm147, %v146, %v144
  %v149 = vmul.f32 %v148, 2.0
  %v150 = vmul.f32 %v148, %v148
  %v151 = vsub.f32 1.0, %v150
  %v152 = vmax.f32 %v151, 0.0
  %v153 = vrsqrt.pop %v152
  %v154 = vmul.f32 %v153, %v152
  %v155 = vmul.f32 %v154, %v153
  %v156 = vmul.f32 0.5, %v155
  %v157 = vsub.f32 1.5, %v156
  %v158 = vmul.f32 %v153, %v157
  %v159 = vmul.f32 %v152, %v158
  %vm160 = vcmp.eq.f32.partialorder %v152, inf
  %v161 = vsel %vm160, %v152, %v159
  %vm162 = vcmp.eq.f32.partialorder %v152, 0.0
  %v163 = vand.u32 %v152, 2147483648
  %v164 = vsel %vm162, %v163, %v161
  %v165 = vmul.f32 %v149, %v164
  %v166 = vadd.f32 %v117, 1e-07
  %v167 = vrcp.pop %v166
  %v168 = vmul.f32 %v124, %v167
  %v169 = vadd.f32 %v120, 1e-07
  %v170 = vrcp.pop %v169
  %v171 = vmul.f32 %v128, %v170
  %v172 = vsub.f32 %v165, 2.0
  %v173 = vmul.f32 %v172, %v168
  %v174 = vmul.f32 %v173, %v168
  %v175 = vmul.f32 %v174, 1.442695
  %v176 = vpow.pop %v175
  %v177 = vsub.f32 2.0, %v176
  %v178 = vmul.f32 %v172, %v171
  %v179 = vmul.f32 %v178, %v171
  %v180 = vmul.f32 %v179, 1.442695
  %v181 = vpow.pop %v180
  %v182 = vsub.f32 %v177, %v181
  %v183 = vsub.f32 %v106, %v39
  %v184 = vand.u32 2147483647, %v183
  %v185 = vmax.f32 %v106, %v39
  %v186 = vadd.f32 %v185, 1e-07
  %v187 = vrcp.pop %v186
  %v188 = vmul.f32 %v184, %v187
  %v189 = vsub.f32 %v108, %v41
  %v190 = vand.u32 2147483647, %v189
  %v191 = vmax.f32 %v108, %v41
  %v192 = vadd.f32 %v191, 1e-07
  %v193 = vrcp.pop %v192
  %v194 = vmul.f32 %v190, %v193
  %v195 = vsub.f32 0.0, %v188
  %v196 = vmul.f32 %v195, 1.442695
  %v197 = vpow.pop %v196
  %v198 = vsub.f32 1.0, %v197
  %v199 = vsub.f32 0.0, %v194
  %v200 = vmul.f32 %v199, 1.442695
  %v201 = vpow.pop %v200
  %v202 = vsub.f32 1.0, %v201
  %v203 = vmul.f32 %v198, %v198
  %v204 = vmul.f32 %v202, %v202
  %v205 = vmul.f32 %v203, %v203
  %v206 = vmul.f32 %v204, %v204
  %v207 = vadd.f32 %v205, %v206
  %v208 = vadd.f32 %v182, %v207
  %v209 = vmul.f32 %v208, 0.5
  %v210 = vsub.f32 %v114, %v209
  %211 = vst [vmem:[%s2] sm:$0xff] %v210
  // Predicated region
  $region6: #{_lambda_.2} parent=0 // pred_check
    _
  $region7: #{_lambda_.2} parent=0 // pred_check_branch
    %213 = sbr.rel (0) target = $region9
  $region8: #{_lambda_.2} parent=0 // pred_region
    _
  $region9: #{_lambda_.2} parent=0 // pred_fallthru
    _
  // Predicated region
  $region10: #{_lambda_.2} parent=0 // pred_check
    _
  $region11: #{_lambda_.2} parent=0 // pred_check_branch
    %215 = sbr.rel (0) target = $region13
  $region12: #{_lambda_.2} parent=0 // pred_region
    _
  $region13: #{_lambda_.2} parent=0 // pred_fallthru
    _
  // Predicated region
  $region14: #{_lambda_.2} parent=0 // pred_check
    _
  $region15: #{_lambda_.2} parent=0 // pred_check_branch
    %217 = sbr.rel (0) target = $region17
  $region16: #{_lambda_.2} parent=0 // pred_region
    _
  $region17: #{_lambda_.2} parent=0 // pred_fallthru
    _
  // Predicated region
  $region18: #{_lambda_.2} parent=0 // pred_check
    _
  $region19: #{_lambda_.2} parent=0 // pred_check_branch
    %219 = sbr.rel (0) target = $region21
  $region20: #{_lambda_.2} parent=0 // pred_region
    _
  $region21: #{_lambda_.2} parent=0 // pred_fallthru
    _

</llo_original>
